<compile_context>
chip_gen: v7x
topology: tpu7x:2x2x1
jax: 0.10.0
libtpu: 0.0.40
codegen_flags: <defaults>
</compile_context>

<pallas_src>
import functools

import jax
import jax.numpy as jnp
import numpy as np
from jax.experimental import pallas as pl
from jax.experimental.pallas import tpu as pltpu


def channel_attention_kernel(x_ref, w1_ref, w2_ref, o_ref, acc_ref, *,
                             hw, tile_hw, block_b):
    # x_ref   : (block_b, C, tile_hw)  one batch block, one spatial tile (native dtype)
    # w1_ref  : (Cr, C) f32            first 1x1 conv weight
    # w2_ref  : (C, Cr) f32            second 1x1 conv weight
    # o_ref   : (block_b, C, 1) f32    sigmoid(fc(avg_pool) + fc(max_pool))
    # acc_ref : (block_b, C, 2) f32    lane 0 = running sum, lane 1 = running max
    k = pl.program_id(1)
    nk = pl.num_programs(1)

    @pl.when(k == 0)
    def _init():
        lane = jax.lax.broadcasted_iota(jnp.int32, acc_ref.shape, 2)
        acc_ref[...] = jnp.where(lane == 0, 0.0, -jnp.inf).astype(jnp.float32)

    def _accumulate(x_sum, x_max):
        # keepdims keeps C on the sublane axis -> no per-tile XLU relayout.
        acc_ref[:, :, 0:1] = acc_ref[:, :, 0:1] + jnp.sum(x_sum, axis=-1, keepdims=True)
        acc_ref[:, :, 1:2] = jnp.maximum(acc_ref[:, :, 1:2],
                                         jnp.max(x_max, axis=-1, keepdims=True))

    has_tail = (hw % tile_hw) != 0

    if not has_tail:
        xf = x_ref[...].astype(jnp.float32)
        _accumulate(xf, xf)
    else:
        # Unmasked fast path for all interior tiles.
        @pl.when(k < nk - 1)
        def _interior():
            xf = x_ref[...].astype(jnp.float32)
            _accumulate(xf, xf)

        # Masked path only on the final (partial) tile: padded lanes hold
        # unspecified data and must not reach the sum/max.
        @pl.when(k == nk - 1)
        def _tail():
            xf = x_ref[...].astype(jnp.float32)
            lane = jax.lax.broadcasted_iota(jnp.int32, xf.shape, 2)
            valid = (k * tile_hw + lane) < hw
            _accumulate(jnp.where(valid, xf, 0.0), jnp.where(valid, xf, -jnp.inf))

    @pl.when(k == nk - 1)
    def _finalize():
        c = acc_ref.shape[1]
        # Column 0 (sum) -> mean via 1/HW; column 1 (max) untouched.
        col = jax.lax.broadcasted_iota(jnp.int32, (c, 2), 1)
        scale = jnp.where(col == 0, jnp.float32(1.0 / hw), jnp.float32(1.0))
        w1 = w1_ref[...]
        w2 = w2_ref[...]
        for b in range(block_b):          # block_b is small & static -> unrolled
            pooled = acc_ref[b] * scale   # (C, 2): [mean_col, max_col]
            # Fused shared MLP, column-oriented (no transpose needed).
            h = jnp.maximum(
                jnp.dot(w1, pooled, preferred_element_type=jnp.float32), 0.0)   # (Cr, 2)
            out2 = jnp.dot(w2, h, preferred_element_type=jnp.float32)           # (C, 2)
            out = out2[:, 0:1] + out2[:, 1:2]                                   # (C, 1)
            o_ref[b] = jax.nn.sigmoid(out).astype(o_ref.dtype)


def _vmem_capacity_bytes():
    try:
        info = pltpu.get_tpu_info()
        for attr in ("vmem_capacity_bytes", "vmem_bytes", "vmem_size_bytes"):
            v = getattr(info, attr, None)
            if v:
                return int(v)
    except Exception:
        pass
    return 64 * 1024 * 1024  # conservative: v7x per-TC VMEM


def _generation_defaults():
    """(target_block_bytes, vmem_limit_bytes) sized per TPU generation."""
    vmem = _vmem_capacity_bytes()
    if vmem >= 100 * 1024 * 1024:                  # v5e / v6e: 128 MiB VMEM
        return 8 * 1024 * 1024, 64 * 1024 * 1024
    return 8 * 1024 * 1024, 44 * 1024 * 1024       # v7x: 64 MiB per TensorCore


def _pick_tile_hw(hw, c, itemsize, target_block_bytes):
    """Lane-dense spatial tile: multiple of 128 (or full HW), ~target bytes per row-block."""
    if hw <= 128:
        return hw
    t = max(128, (target_block_bytes // max(1, c * itemsize)) // 128 * 128)
    return hw if t >= hw else t


def _pick_block_b(b, c, tile_hw, itemsize, target_block_bytes, cap=8):
    """Batch rows per block (divisor of B) so each block is ~target bytes; helps small HW."""
    per_row = max(1, c * tile_hw * itemsize)
    tb = int(min(cap, max(1, target_block_bytes // per_row), b))
    while b % tb != 0:
        tb -= 1
    return max(1, tb)


def channel_attention(x_nchw, w1, w2, *, tile_hw=None, block_b=None,
                      vmem_limit_bytes=None):
    """x_nchw: (B, C, H, W); w1: (Cr, C); w2: (C, Cr). Returns (B, C, 1, 1) f32."""
    B, C, H, W = x_nchw.shape
    Cr = w1.shape[0]
    HW = H * W

    x_flat = x_nchw.reshape(B, C, HW)               # native dtype; no wrapper upcast
    w1f = w1.astype(jnp.float32)                    # (Cr, C)
    w2f = w2.astype(jnp.float32)                    # (C, Cr)

    itemsize = int(jnp.dtype(x_flat.dtype).itemsize)
    target_block_bytes, default_vmem_limit = _generation_defaults()
    if vmem_limit_bytes is None:
        vmem_limit_bytes = default_vmem_limit

    if tile_hw is None:
        tile_hw = _pick_tile_hw(HW, C, itemsize, target_block_bytes)
    assert tile_hw == HW or tile_hw % 128 == 0, "tile_hw must be 128-aligned or full HW"
    if block_b is None:
        block_b = _pick_block_b(B, C, tile_hw, itemsize, target_block_bytes)
    assert B % block_b == 0, "block_b must divide B"
    nk = pl.cdiv(HW, tile_hw)

    kernel = functools.partial(channel_attention_kernel,
                               hw=HW, tile_hw=tile_hw, block_b=block_b)

    cost = pl.CostEstimate(
        flops=int(2 * B * C * HW + 8 * B * C * Cr),
        transcendentals=int(B * C),
        bytes_accessed=int(B * C * HW * itemsize + 2 * C * Cr * 4 + B * C * 4),
    )

    out = pl.pallas_call(
        kernel,
        out_shape=jax.ShapeDtypeStruct((B, C, 1), jnp.float32),
        grid_spec=pltpu.PrefetchScalarGridSpec(
            num_scalar_prefetch=0,
            grid=(B // block_b, nk),
            in_specs=[
                pl.BlockSpec((block_b, C, tile_hw), lambda b, k: (b, 0, k)),
                pl.BlockSpec((Cr, C), lambda b, k: (0, 0)),
                pl.BlockSpec((C, Cr), lambda b, k: (0, 0)),
            ],
            out_specs=pl.BlockSpec((block_b, C, 1), lambda b, k: (b, 0, 0)),
            scratch_shapes=[
                pltpu.VMEM((block_b, C, 2), jnp.float32),   # [:, :, 0]=sum, [:, :, 1]=max
            ],
        ),
        compiler_params=pltpu.CompilerParams(
            dimension_semantics=("parallel", "arbitrary"),
            vmem_limit_bytes=int(vmem_limit_bytes),
        ),
        cost_estimate=cost,
    )(x_flat, w1f, w2f)

    return out.reshape(B, C, 1, 1)


def channel_attention_ref(x_nchw, w1, w2):
    """Pure-JAX reference mirroring the PyTorch forward."""
    x = x_nchw.astype(jnp.float32)
    avg = jnp.mean(x, axis=(2, 3))                  # (B, C)
    mx = jnp.max(x, axis=(2, 3))                    # (B, C)

    def fc(v):
        h = jnp.maximum(v @ w1.astype(jnp.float32).T, 0.0)
        return h @ w2.astype(jnp.float32).T

    out = jax.nn.sigmoid(fc(avg) + fc(mx))
    return out[:, :, None, None]


if __name__ == "__main__":
    key = jax.random.PRNGKey(0)

    # --- Test 1: module-default small shape (single spatial tile, batch-tiled block). ---
    B, C, H, W = 2, 16, 16, 16
    ratio = 4
    Cr = C // ratio
    kx, k1, k2, key = jax.random.split(key, 4)
    x = jax.random.normal(kx, (B, C, H, W), dtype=jnp.float32)
    w1 = jax.random.uniform(k1, (Cr, C), jnp.float32, -1.0, 1.0) / np.sqrt(C)
    w2 = jax.random.uniform(k2, (C, Cr), jnp.float32, -1.0, 1.0) / np.sqrt(Cr)

    out = jax.block_until_ready(channel_attention(x, w1, w2))
    ref = jax.block_until_ready(channel_attention_ref(x, w1, w2))
    assert out.shape == (B, C, 1, 1), out.shape
    np.testing.assert_allclose(np.asarray(out), np.asarray(ref), rtol=2e-5, atol=2e-5)

    # --- Test 2: bf16 input, forced small tile so multi-tile accumulation and the
    #             last-tile-only tail masking path are exercised (HW = 2500, not /128). ---
    B2, C2, H2, W2 = 2, 32, 50, 50
    Cr2 = C2 // ratio
    kx, k1, k2, key = jax.random.split(key, 4)
    x2 = jax.random.normal(kx, (B2, C2, H2, W2), dtype=jnp.bfloat16)
    w1b = jax.random.uniform(k1, (Cr2, C2), jnp.float32, -1.0, 1.0) / np.sqrt(C2)
    w2b = jax.random.uniform(k2, (C2, Cr2), jnp.float32, -1.0, 1.0) / np.sqrt(Cr2)

    out2 = jax.block_until_ready(channel_attention(x2, w1b, w2b, tile_hw=128))
    ref2 = jax.block_until_ready(channel_attention_ref(x2, w1b, w2b))
    assert out2.shape == (B2, C2, 1, 1), out2.shape
    np.testing.assert_allclose(np.asarray(out2), np.asarray(ref2), rtol=2e-5, atol=2e-5)

    print("KERNEL_OK")
</pallas_src>

<mosaic_0001>
module attributes {stable_mosaic.version = 11 : i64} {
  func.func @channel_attention_kernel(%arg0: i32, %arg1: i32, %arg2: memref<2x16x256xf32, #tpu.memory_space<vmem>>, %arg3: memref<4x16xf32, #tpu.memory_space<vmem>>, %arg4: memref<16x4xf32, #tpu.memory_space<vmem>>, %arg5: memref<2x16x1xf32, #tpu.memory_space<vmem>>, %arg6: memref<2x16x2xf32, #tpu.memory_space<vmem>>) attributes {dimension_semantics = [#tpu.dimension_semantics<parallel>, #tpu.dimension_semantics<arbitrary>], iteration_bounds = array<i64: 1, 1>, scalar_prefetch = 0 : i64, scratch_operands = 1 : i64, tpu.core_type = #tpu.core_type<tc>, window_params = [{transform_indices = @transform_0, window_bounds = array<i64: 2, 16, 256>}, {pipeline_mode = #tpu.pipeline_mode<synchronous>, transform_indices = @transform_1, window_bounds = array<i64: 4, 16>}, {pipeline_mode = #tpu.pipeline_mode<synchronous>, transform_indices = @transform_2, window_bounds = array<i64: 16, 4>}, {transform_indices = @transform_3, window_bounds = array<i64: 2, 16, 1>}]} {
    %c0_i32 = arith.constant 0 : i32
    %0 = arith.cmpi eq, %arg1, %c0_i32 : i32
    %1 = arith.extui %0 : i1 to i32
    %c0_i32_0 = arith.constant 0 : i32
    %2 = arith.cmpi ne, %1, %c0_i32_0 : i32
    scf.if %2 {
      %17 = tpu.iota {dimensions = array<i32: 2>} : vector<2x16x2xi32>
      %c0_i32_17 = arith.constant 0 : i32
      %18 = vector.broadcast %c0_i32_17 : i32 to vector<2x16x2xi32>
      %19 = arith.cmpi eq, %17, %18 : vector<2x16x2xi32>
      %cst_18 = arith.constant 0.000000e+00 : f32
      %cst_19 = arith.constant 0xFF800000 : f32
      %20 = vector.broadcast %cst_18 : f32 to vector<2x16x2xf32>
      %21 = vector.broadcast %cst_19 : f32 to vector<2x16x2xf32>
      %22 = arith.select %19, %20, %21 : vector<2x16x2xi1>, vector<2x16x2xf32>
      %c0_20 = arith.constant 0 : index
      %c0_21 = arith.constant 0 : index
      %c0_22 = arith.constant 0 : index
      %23 = vector.load %arg6[%c0_20, %c0_21, %c0_22] : memref<2x16x2xf32, #tpu.memory_space<vmem>>, vector<2x16x2xf32>
      tpu.vector_store %arg6[%c0_20, %c0_21, %c0_22], %22 {strides = array<i32>} : memref<2x16x2xf32, #tpu.memory_space<vmem>>, vector<2x16x2xf32>,
    } else {
    }
    %c0 = arith.constant 0 : index
    %c0_1 = arith.constant 0 : index
    %c0_2 = arith.constant 0 : index
    %3 = vector.load %arg2[%c0, %c0_1, %c0_2] : memref<2x16x256xf32, #tpu.memory_space<vmem>>, vector<2x16x256xf32>
    %c0_3 = arith.constant 0 : index
    %c0_4 = arith.constant 0 : index
    %c0_5 = arith.constant 0 : index
    %4 = vector.load %arg6[%c0_3, %c0_4, %c0_5] : memref<2x16x2xf32, #tpu.memory_space<vmem>>, vector<2x16x1xf32>
    %cst = arith.constant dense<0.000000e+00> : vector<2x16xf32>
    %5 = vector.multi_reduction <add>, %3, %cst [2] : vector<2x16x256xf32> to vector<2x16xf32>
    %6 = vector.shape_cast %5 : vector<2x16xf32> to vector<2x16x1xf32>
    %7 = arith.addf %4, %6 : vector<2x16x1xf32>
    %c0_6 = arith.constant 0 : index
    %c0_7 = arith.constant 0 : index
    %c0_8 = arith.constant 0 : index
    %8 = vector.load %arg6[%c0_6, %c0_7, %c0_8] : memref<2x16x2xf32, #tpu.memory_space<vmem>>, vector<2x16x1xf32>
    tpu.vector_store %arg6[%c0_6, %c0_7, %c0_8], %7 {strides = array<i32>} : memref<2x16x2xf32, #tpu.memory_space<vmem>>, vector<2x16x1xf32>,
    %c0_9 = arith.constant 0 : index
    %c0_10 = arith.constant 0 : index
    %c1 = arith.constant 1 : index
    %9 = vector.load %arg6[%c0_9, %c0_10, %c1] : memref<2x16x2xf32, #tpu.memory_space<vmem>>, vector<2x16x1xf32>
    %cst_11 = arith.constant dense<0xFF800000> : vector<2x16xf32>
    %10 = vector.multi_reduction <maximumf>, %3, %cst_11 [2] : vector<2x16x256xf32> to vector<2x16xf32>
    %11 = vector.shape_cast %10 : vector<2x16xf32> to vector<2x16x1xf32>
    %12 = arith.maximumf %9, %11 : vector<2x16x1xf32>
    %c0_12 = arith.constant 0 : index
    %c0_13 = arith.constant 0 : index
    %c1_14 = arith.constant 1 : index
    %13 = vector.load %arg6[%c0_12, %c0_13, %c1_14] : memref<2x16x2xf32, #tpu.memory_space<vmem>>, vector<2x16x1xf32>
    tpu.vector_store %arg6[%c0_12, %c0_13, %c1_14], %12 {strides = array<i32>} : memref<2x16x2xf32, #tpu.memory_space<vmem>>, vector<2x16x1xf32>,
    %c0_i32_15 = arith.constant 0 : i32
    %14 = arith.cmpi eq, %arg1, %c0_i32_15 : i32
    %15 = arith.extui %14 : i1 to i32
    %c0_i32_16 = arith.constant 0 : i32
    %16 = arith.cmpi ne, %15, %c0_i32_16 : i32
    scf.if %16 {
      %17 = tpu.iota {dimensions = array<i32: 1>} : vector<16x2xi32>
      %c0_i32_17 = arith.constant 0 : i32
      %18 = vector.broadcast %c0_i32_17 : i32 to vector<16x2xi32>
      %19 = arith.cmpi eq, %17, %18 : vector<16x2xi32>
      %cst_18 = arith.constant 3.906250e-03 : f32
      %cst_19 = arith.constant 1.000000e+00 : f32
      %20 = vector.broadcast %cst_18 : f32 to vector<16x2xf32>
      %21 = vector.broadcast %cst_19 : f32 to vector<16x2xf32>
      %22 = arith.select %19, %20, %21 : vector<16x2xi1>, vector<16x2xf32>
      %c0_20 = arith.constant 0 : index
      %c0_21 = arith.constant 0 : index
      %23 = vector.load %arg3[%c0_20, %c0_21] : memref<4x16xf32, #tpu.memory_space<vmem>>, vector<4x16xf32>
      %c0_22 = arith.constant 0 : index
      %c0_23 = arith.constant 0 : index
      %24 = vector.load %arg4[%c0_22, %c0_23] : memref<16x4xf32, #tpu.memory_space<vmem>>, vector<16x4xf32>
      %c0_24 = arith.constant 0 : index
      %c0_25 = arith.constant 0 : index
      %c0_26 = arith.constant 0 : index
      %25 = vector.load %arg6[%c0_24, %c0_25, %c0_26] : memref<2x16x2xf32, #tpu.memory_space<vmem>>, vector<1x16x2xf32>
      %26 = vector.shape_cast %25 : vector<1x16x2xf32> to vector<16x2xf32>
      %27 = arith.mulf %26, %22 : vector<16x2xf32>
      %cst_27 = arith.constant dense<0.000000e+00> : vector<4x2xf32>
      %28 = tpu.matmul %23, %27, %cst_27 {dimension_numbers = #tpu.dot_dimension_numbers<[1], [0], [0], [1], [0, 0, 1, 1], [], []>} : vector<4x16xf32>, vector<16x2xf32>, vector<4x2xf32> -> vector<4x2xf32>
      %cst_28 = arith.constant 0.000000e+00 : f32
      %29 = vector.broadcast %cst_28 : f32 to vector<4x2xf32>
      %30 = arith.maximumf %28, %29 : vector<4x2xf32>
      %cst_29 = arith.constant dense<0.000000e+00> : vector<16x2xf32>
      %31 = tpu.matmul %24, %30, %cst_29 {dimension_numbers = #tpu.dot_dimension_numbers<[1], [0], [0], [1], [0, 0, 1, 1], [], []>} : vector<16x4xf32>, vector<4x2xf32>, vector<16x2xf32> -> vector<16x2xf32>
      %32 = vector.extract_strided_slice %31 {offsets = [0, 0], sizes = [16, 1], strides = [1, 1]} : vector<16x2xf32> to vector<16x1xf32>
      %33 = vector.extract_strided_slice %31 {offsets = [0, 1], sizes = [16, 1], strides = [1, 1]} : vector<16x2xf32> to vector<16x1xf32>
      %34 = arith.addf %32, %33 : vector<16x1xf32>
      %35 = arith.negf %34 : vector<16x1xf32>
      %36 = math.exp %35 : vector<16x1xf32>
      %cst_30 = arith.constant 1.000000e+00 : f32
      %37 = vector.broadcast %cst_30 : f32 to vector<16x1xf32>
      %38 = arith.addf %37, %36 : vector<16x1xf32>
      %39 = arith.divf %37, %38 : vector<16x1xf32>
      %c0_31 = arith.constant 0 : index
      %c0_32 = arith.constant 0 : index
      %c0_33 = arith.constant 0 : index
      %40 = vector.load %arg5[%c0_31, %c0_32, %c0_33] : memref<2x16x1xf32, #tpu.memory_space<vmem>>, vector<1x16x1xf32>
      %41 = vector.shape_cast %40 : vector<1x16x1xf32> to vector<16x1xf32>
      %42 = vector.shape_cast %39 : vector<16x1xf32> to vector<1x16x1xf32>
      tpu.vector_store %arg5[%c0_31, %c0_32, %c0_33], %42 {strides = array<i32>} : memref<2x16x1xf32, #tpu.memory_space<vmem>>, vector<1x16x1xf32>,
      %c1_34 = arith.constant 1 : index
      %c0_35 = arith.constant 0 : index
      %c0_36 = arith.constant 0 : index
      %43 = vector.load %arg6[%c1_34, %c0_35, %c0_36] : memref<2x16x2xf32, #tpu.memory_space<vmem>>, vector<1x16x2xf32>
      %44 = vector.shape_cast %43 : vector<1x16x2xf32> to vector<16x2xf32>
      %45 = arith.mulf %44, %22 : vector<16x2xf32>
      %cst_37 = arith.constant dense<0.000000e+00> : vector<4x2xf32>
      %46 = tpu.matmul %23, %45, %cst_37 {dimension_numbers = #tpu.dot_dimension_numbers<[1], [0], [0], [1], [0, 0, 1, 1], [], []>} : vector<4x16xf32>, vector<16x2xf32>, vector<4x2xf32> -> vector<4x2xf32>
      %cst_38 = arith.constant 0.000000e+00 : f32
      %47 = vector.broadcast %cst_38 : f32 to vector<4x2xf32>
      %48 = arith.maximumf %46, %47 : vector<4x2xf32>
      %cst_39 = arith.constant dense<0.000000e+00> : vector<16x2xf32>
      %49 = tpu.matmul %24, %48, %cst_39 {dimension_numbers = #tpu.dot_dimension_numbers<[1], [0], [0], [1], [0, 0, 1, 1], [], []>} : vector<16x4xf32>, vector<4x2xf32>, vector<16x2xf32> -> vector<16x2xf32>
      %50 = vector.extract_strided_slice %49 {offsets = [0, 0], sizes = [16, 1], strides = [1, 1]} : vector<16x2xf32> to vector<16x1xf32>
      %51 = vector.extract_strided_slice %49 {offsets = [0, 1], sizes = [16, 1], strides = [1, 1]} : vector<16x2xf32> to vector<16x1xf32>
      %52 = arith.addf %50, %51 : vector<16x1xf32>
      %53 = arith.negf %52 : vector<16x1xf32>
      %54 = math.exp %53 : vector<16x1xf32>
      %cst_40 = arith.constant 1.000000e+00 : f32
      %55 = vector.broadcast %cst_40 : f32 to vector<16x1xf32>
      %56 = arith.addf %55, %54 : vector<16x1xf32>
      %57 = arith.divf %55, %56 : vector<16x1xf32>
      %c1_41 = arith.constant 1 : index
      %c0_42 = arith.constant 0 : index
      %c0_43 = arith.constant 0 : index
      %58 = vector.load %arg5[%c1_41, %c0_42, %c0_43] : memref<2x16x1xf32, #tpu.memory_space<vmem>>, vector<1x16x1xf32>
      %59 = vector.shape_cast %58 : vector<1x16x1xf32> to vector<16x1xf32>
      %60 = vector.shape_cast %57 : vector<16x1xf32> to vector<1x16x1xf32>
      tpu.vector_store %arg5[%c1_41, %c0_42, %c0_43], %60 {strides = array<i32>} : memref<2x16x1xf32, #tpu.memory_space<vmem>>, vector<1x16x1xf32>,
    } else {
    }
    return
  }
  func.func @transform_0(%arg0: i32, %arg1: i32) -> (i32, i32, i32) {
    %c0_i32 = arith.constant 0 : i32
    %c0_i32_0 = arith.constant 0 : i32
    return %arg0, %c0_i32, %arg1 : i32, i32, i32
  }
  func.func @transform_1(%arg0: i32, %arg1: i32) -> (i32, i32) {
    %c0_i32 = arith.constant 0 : i32
    %c0_i32_0 = arith.constant 0 : i32
    %c0_i32_1 = arith.constant 0 : i32
    return %c0_i32, %c0_i32_0 : i32, i32
  }
  func.func @transform_2(%arg0: i32, %arg1: i32) -> (i32, i32) {
    %c0_i32 = arith.constant 0 : i32
    %c0_i32_0 = arith.constant 0 : i32
    %c0_i32_1 = arith.constant 0 : i32
    return %c0_i32, %c0_i32_0 : i32, i32
  }
  func.func @transform_3(%arg0: i32, %arg1: i32) -> (i32, i32, i32) {
    %c0_i32 = arith.constant 0 : i32
    %c0_i32_0 = arith.constant 0 : i32
    %c0_i32_1 = arith.constant 0 : i32
    return %arg0, %c0_i32, %c0_i32_0 : i32, i32, i32
  }
}

</mosaic_0001>

<llo_original>
// kernel: tpu_custom_call.1
$region0: #{tpu_custom_call.1}
  #allocation0 [shape = 'u32[]', space=smem, size = 0x4, offset = 0x4, fixed_abs, tag = 'smem constant byte address 0x4 - core index']
  #allocation1 [shape = 'u32[144,128]{1,0:T(1,128)}', space=vmem, size = 0x12000, scoped, tag = 'internal scratch']
  #allocation2 [shape = 'f32[2,16,2]{2,1,0:T(8,128)}', space=vmem, size = 0x4000, scoped, tag = 'scratch operand']
  %s0 = inlined_call_operand.hbm [shape: f32[2,16,256], index: 0, kind: input, shape index: {}]
  %s1 = inlined_call_operand.vmem [shape: f32[4,16], index: 1, kind: input, shape index: {}]
  %s2 = inlined_call_operand.vmem [shape: f32[16,4], index: 2, kind: input, shape index: {}]
  %s3 = inlined_call_operand.vmem [shape: f32[2,16,1], index: 3, kind: output, shape index: {}]
  %s4 = sld [smem:[#allocation0]]
  $region34: #{tpu_custom_call.1} parent=0
    _
  %s6 = ssub.s32 1, %s4
  %s7 = scalar_select 0, %s6, %s4
  $region1: #{tpu_custom_call.1} parent=0
    #allocation3 [shape = 'u8[32768]{0}', space=vmem, size = 0x8000, scoped, tag = 'input window, operand 0, single buffered']
    #allocation4 [shape = 's32[1]{0}', space=sflag, size = 0x4, scoped, tag = 'scoped memory for tpu_custom_call.1']
    %8 = vsyncpa [#allocation4], 0
    // Predicated region
    $region2: #{tpu_custom_call.1} parent=1 // pred_check
      _
    $region3: #{tpu_custom_call.1} parent=1 // pred_check_branch
      %10 = sbr.rel (0) target = $region5
    $region4: #{tpu_custom_call.1} parent=1 // pred_region
      %s12 = ssub.s32 1024, 1024
      %13 = vsyncadd [#allocation4], %s12
      %s14 = sshll.u32 [#allocation3], 4
      %s15 = int_to_ptr.vmem [resolvable:$true] %s14
      %20 = dma.hbm_to_vmem [thread:$0]  %s0, 1024, %s15, [#allocation4], 256, 256, 16
    $region5: #{tpu_custom_call.1} parent=1 // pred_fallthru
      _
    // Predicated region
    $region6: #{tpu_custom_call.1} parent=1 // pred_check
      _
    $region7: #{tpu_custom_call.1} parent=1 // pred_check_branch
      %22 = sbr.rel (0) target = $region9
    $region8: #{tpu_custom_call.1} parent=1 // pred_region
      _
    $region9: #{tpu_custom_call.1} parent=1 // pred_fallthru
      _
    // Predicated region
    $region10: #{tpu_custom_call.1} parent=1 // pred_check
      _
    $region11: #{tpu_custom_call.1} parent=1 // pred_check_branch
      %24 = sbr.rel (0) target = $region13
    $region12: #{tpu_custom_call.1} parent=1 // pred_region
      _
    $region13: #{tpu_custom_call.1} parent=1 // pred_fallthru
      _
    // Predicated region
    $region14: #{tpu_custom_call.1} parent=1 // pred_check
      _
    $region15: #{tpu_custom_call.1} parent=1 // pred_check_branch
      %26 = sbr.rel (0) target = $region17
    $region16: #{tpu_custom_call.1} parent=1 // pred_region
      %27 = dma.done [#allocation4], 1024
    $region17: #{tpu_custom_call.1} parent=1 // pred_fallthru
      _
    %p28 = scmp.eq.s32.totalorder 0, 0
    // Predicated region
    $region18: #{tpu_custom_call.1} parent=1 // pred_check
      %p29 = pneg %p28
    $region19: #{tpu_custom_call.1} parent=1 // pred_check_branch
      %31 = sbr.rel (%p29) target = $region21
    $region20: #{tpu_custom_call.1} parent=1 // pred_region
      %v32 = vlaneseq
      %v33 = vand.u32 %v32, 127
      %vm34 = vcmp.eq.s32.totalorder %v33, 0
      %v35 = vsel %vm34, 0.0, -inf
      %vm36 = vcmask 15360
      %37 = vst.msk [vmem:[#allocation2] sm:$0xff] %vm36, %v35
      %38 = vst.msk [vmem:[#allocation2 + $0x8] sm:$0xff] %vm36, %v35
      %39 = vst.msk [vmem:[#allocation2 + $0x10] sm:$0xff] %vm36, %v35
      %40 = vst.msk [vmem:[#allocation2 + $0x18] sm:$0xff] %vm36, %v35
    $region21: #{tpu_custom_call.1} parent=1 // pred_fallthru
      _
    %v41 = vld [vmem:[#allocation3] sm:$0xff]
    %v42 = vld [vmem:[#allocation3 + $0x8] sm:$0xff]
    %v43 = vld [vmem:[#allocation3 + $0x10] sm:$0xff]
    %v44 = vld [vmem:[#allocation3 + $0x18] sm:$0xff]
    %v45 = vld [vmem:[#allocation3 + $0x20] sm:$0xff]
    %v46 = vld [vmem:[#allocation3 + $0x28] sm:$0xff]
    %v47 = vld [vmem:[#allocation3 + $0x30] sm:$0xff]
    %v48 = vld [vmem:[#allocation3 + $0x38] sm:$0xff]
    %v49 = vld [vmem:[#allocation2] sm:$0xff]
    %v50 = vld [vmem:[#allocation2 + $0x8] sm:$0xff]
    %v51 = vld [vmem:[#allocation2 + $0x10] sm:$0xff]
    %v52 = vld [vmem:[#allocation2 + $0x18] sm:$0xff]
    %v53 = vadd.f32 %v41, %v42
    %54 = vadd.xlane.f32.xlu0 %v53
    %v55 = vpop.xlane.xlu0 %54
    %v56 = vadd.f32 %v43, %v44
    %57 = vadd.xlane.f32.xlu0 %v56
    %v58 = vpop.xlane.xlu0 %57
    %v59 = vadd.f32 %v45, %v46
    %60 = vadd.xlane.f32.xlu0 %v59
    %v61 = vpop.xlane.xlu0 %60
    %v62 = vadd.f32 %v47, %v48
    %63 = vadd.xlane.f32.xlu0 %v62
    %v64 = vpop.xlane.xlu0 %63
    %v65 = vadd.f32 %v49, %v55
    %v66 = vadd.f32 %v50, %v58
    %v67 = vadd.f32 %v51, %v61
    %v68 = vadd.f32 %v52, %v64
    %vm69 = vcmask 7168
    %70 = vst.msk [vmem:[#allocation2] sm:$0xff] %vm69, %v65
    %71 = vst.msk [vmem:[#allocation2 + $0x8] sm:$0xff] %vm69, %v66
    %72 = vst.msk [vmem:[#allocation2 + $0x10] sm:$0xff] %vm69, %v67
    %73 = vst.msk [vmem:[#allocation2 + $0x18] sm:$0xff] %vm69, %v68
    %v74 = vld [vmem:[#allocation2] sm:$0xff]
    %v75 = vld [vmem:[#allocation2 + $0x8] sm:$0xff]
    %v76 = vld [vmem:[#allocation2 + $0x10] sm:$0xff]
    %v77 = vld [vmem:[#allocation2 + $0x18] sm:$0xff]
    %v78 = vmax.f32 %v41, %v42
    %79 = vmax.xlane.f32.xlu0 %v78
    %v80 = vpop.xlane.xlu0 %79
    %v81 = vmax.f32 %v43, %v44
    %82 = vmax.xlane.f32.xlu0 %v81
    %v83 = vpop.xlane.xlu0 %82
    %v84 = vmax.f32 %v45, %v46
    %85 = vmax.xlane.f32.xlu0 %v84
    %v86 = vpop.xlane.xlu0 %85
    %v87 = vmax.f32 %v47, %v48
    %88 = vmax.xlane.f32.xlu0 %v87
    %v89 = vpop.xlane.xlu0 %88
    %v90 = vmax.f32 %v74, %v80
    %v91 = vmax.f32 %v75, %v83
    %v92 = vmax.f32 %v76, %v86
    %v93 = vmax.f32 %v77, %v89
    %vm94 = vcmask 15368
    %95 = vst.msk [vmem:[#allocation2] sm:$0xff] %vm94, %v90
    %96 = vst.msk [vmem:[#allocation2 + $0x8] sm:$0xff] %vm94, %v91
    %97 = vst.msk [vmem:[#allocation2 + $0x10] sm:$0xff] %vm94, %v92
    %98 = vst.msk [vmem:[#allocation2 + $0x18] sm:$0xff] %vm94, %v93
    // Predicated region
    $region22: #{tpu_custom_call.1} parent=1 // pred_check
      %p99 = pneg %p28
    $region23: #{tpu_custom_call.1} parent=1 // pred_check_branch
      %101 = sbr.rel (%p99) target = $region25
    $region24: #{tpu_custom_call.1} parent=1 // pred_region
      %v102 = vlaneseq
      %v103 = vand.u32 %v102, 127
      %vm104 = vcmp.eq.s32.totalorder %v103, 0
      %v105 = vsel %vm104, 0.00390625, 1.0
      %v106 = vld [vmem:[%s1] sm:$0xf]
      %v107 = vld [vmem:[%s2] sm:$0xff]
      %v108 = vld [vmem:[%s2 + $0x8] sm:$0xff]
      %v109 = vld [vmem:[#allocation2] sm:$0xff]
      %v110 = vld [vmem:[#allocation2 + $0x8] sm:$0xff]
      %v111 = vmul.f32 %v109, %v105
      %v112 = vmul.f32 %v110, %v105
      %vm113 = vcmask 130048
      %v115 = vsel %vm113, %v106, 0
      %117 = vmatprep.subr.mxu0 0.0
      %118 = vmatpush1.msra.mxu0 %v111
      %119 = vmatprep.subr.mxu0 0.0
      %120 = vmatpush1.msra.mxu0 %v112
      %121 = vmatprep.subr.mxu0 0.0
      %122 = vmatpush1.msra.mxu0 0.0
      %123 = vmatprep.subr.mxu0 0.0
      %124 = vmatpush1.msra.mxu0 0.0
      %125 = vmatprep.subr.mxu0 0.0
      %126 = vmatpush1.msra.mxu0 0.0
      %127 = vmatprep.subr.mxu0 0.0
      %128 = vmatpush1.msra.mxu0 0.0
      %129 = vmatprep.subr.mxu0 0.0
      %130 = vmatpush1.msra.mxu0 0.0
      %131 = vmatprep.subr.mxu0 0.0
      %132 = vmatpush1.msra.mxu0 0.0
      %133 = vmatprep.subr.mxu0 0.0
      %134 = vmatpush1.msra.mxu0 0.0
      %135 = vmatprep.subr.mxu0 0.0
      %136 = vmatpush1.msra.mxu0 0.0
      %137 = vmatprep.subr.mxu0 0.0
      %138 = vmatpush1.msra.mxu0 0.0
      %139 = vmatprep.subr.mxu0 0.0
      %140 = vmatpush1.msra.mxu0 0.0
      %141 = vmatprep.subr.mxu0 0.0
      %142 = vmatpush1.msra.mxu0 0.0
      %143 = vmatprep.subr.mxu0 0.0
      %144 = vmatpush1.msra.mxu0 0.0
      %145 = vmatprep.subr.mxu0 0.0
      %146 = vmatpush1.msra.mxu0 0.0
      %147 = vmatprep.subr.mxu0 0.0
      %148 = vmatpush1.msra.mxu0 0.0
      %149 = vmatprep.subr.mxu0 0.0
      %150 = vmatpush1.msra.mxu0 0.0
      %151 = vmatprep.subr.mxu0 0.0
      %152 = vmatpush1.msra.mxu0 0.0
      %153 = vmatprep.subr.mxu0 0.0
      %154 = vmatpush1.msra.mxu0 0.0
      %155 = vmatprep.subr.mxu0 0.0
      %156 = vmatpush1.msra.mxu0 0.0
      %157 = vmatprep.subr.mxu0 0.0
      %158 = vmatpush1.msra.mxu0 0.0
      %159 = vmatprep.subr.mxu0 0.0
      %160 = vmatpush1.msra.mxu0 0.0
      %161 = vmatprep.subr.mxu0 0.0
      %162 = vmatpush1.msra.mxu0 0.0
      %163 = vmatprep.subr.mxu0 0.0
      %164 = vmatpush1.msra.mxu0 0.0
      %165 = vmatprep.subr.mxu0 0.0
      %166 = vmatpush1.msra.mxu0 0.0
      %167 = vmatprep.subr.mxu0 0.0
      %168 = vmatpush1.msra.mxu0 0.0
      %169 = vmatprep.subr.mxu0 0.0
      %170 = vmatpush1.msra.mxu0 0.0
      %171 = vmatprep.subr.mxu0 0.0
      %172 = vmatpush1.msra.mxu0 0.0
      %173 = vmatprep.subr.mxu0 0.0
      %174 = vmatpush1.msra.mxu0 0.0
      %175 = vmatprep.subr.mxu0 0.0
      %176 = vmatpush1.msra.mxu0 0.0
      %177 = vmatprep.subr.mxu0 0.0
      %178 = vmatpush1.msra.mxu0 0.0
      %179 = vmatprep.subr.mxu0 0.0
      %180 = vmatpush1.msra.mxu0 0.0
      %181 = vmatprep.mubr.f32.mxu0 0.0
      %182 = vmatmul.mubr.f32.gmra.mrb[0].mxu0 %v115
      %v183 = vpop.f32.mrb[0].mxu0
      %v184 = vadd.f32 0.0, %v183
      %v185 = vpop.f32.mrb[0].mxu0
      %186 = vdwg.mxu0
      %v187 = vmax.f32 %v184, 0.0
      %vm188 = vcmask 31744
      %v190 = vsel %vm188, %v107, 0
      %v193 = vsel %vm188, %v108, 0
      %vm195 = vcmask 1043456
      %v197 = vsel %vm195, %v187, 0
      %199 = vmatprep.subr.mxu0 0.0
      %200 = vmatpush1.msra.mxu0 %v197
      %201 = vmatprep.subr.mxu0 0.0
      %202 = vmatpush1.msra.mxu0 0.0
      %203 = vmatprep.subr.mxu0 0.0
      %204 = vmatpush1.msra.mxu0 0.0
      %205 = vmatprep.subr.mxu0 0.0
      %206 = vmatpush1.msra.mxu0 0.0
      %207 = vmatprep.subr.mxu0 0.0
      %208 = vmatpush1.msra.mxu0 0.0
      %209 = vmatprep.subr.mxu0 0.0
      %210 = vmatpush1.msra.mxu0 0.0
      %211 = vmatprep.subr.mxu0 0.0
      %212 = vmatpush1.msra.mxu0 0.0
      %213 = vmatprep.subr.mxu0 0.0
      %214 = vmatpush1.msra.mxu0 0.0
      %215 = vmatprep.subr.mxu0 0.0
      %216 = vmatpush1.msra.mxu0 0.0
      %217 = vmatprep.subr.mxu0 0.0
      %218 = vmatpush1.msra.mxu0 0.0
      %219 = vmatprep.subr.mxu0 0.0
      %220 = vmatpush1.msra.mxu0 0.0
      %221 = vmatprep.subr.mxu0 0.0
      %222 = vmatpush1.msra.mxu0 0.0
      %223 = vmatprep.subr.mxu0 0.0
      %224 = vmatpush1.msra.mxu0 0.0
      %225 = vmatprep.subr.mxu0 0.0
      %226 = vmatpush1.msra.mxu0 0.0
      %227 = vmatprep.subr.mxu0 0.0
      %228 = vmatpush1.msra.mxu0 0.0
      %229 = vmatprep.subr.mxu0 0.0
      %230 = vmatpush1.msra.mxu0 0.0
      %231 = vmatprep.subr.mxu0 0.0
      %232 = vmatpush1.msra.mxu0 0.0
      %233 = vmatprep.subr.mxu0 0.0
      %234 = vmatpush1.msra.mxu0 0.0
      %235 = vmatprep.subr.mxu0 0.0
      %236 = vmatpush1.msra.mxu0 0.0
      %237 = vmatprep.subr.mxu0 0.0
      %238 = vmatpush1.msra.mxu0 0.0
      %239 = vmatprep.subr.mxu0 0.0
      %240 = vmatpush1.msra.mxu0 0.0
      %241 = vmatprep.subr.mxu0 0.0
      %242 = vmatpush1.msra.mxu0 0.0
      %243 = vmatprep.subr.mxu0 0.0
      %244 = vmatpush1.msra.mxu0 0.0
      %245 = vmatprep.subr.mxu0 0.0
      %246 = vmatpush1.msra.mxu0 0.0
      %247 = vmatprep.subr.mxu0 0.0
      %248 = vmatpush1.msra.mxu0 0.0
      %249 = vmatprep.subr.mxu0 0.0
      %250 = vmatpush1.msra.mxu0 0.0
      %251 = vmatprep.subr.mxu0 0.0
      %252 = vmatpush1.msra.mxu0 0.0
      %253 = vmatprep.subr.mxu0 0.0
      %254 = vmatpush1.msra.mxu0 0.0
      %255 = vmatprep.subr.mxu0 0.0
      %256 = vmatpush1.msra.mxu0 0.0
      %257 = vmatprep.subr.mxu0 0.0
      %258 = vmatpush1.msra.mxu0 0.0
      %259 = vmatprep.subr.mxu0 0.0
      %260 = vmatpush1.msra.mxu0 0.0
      %261 = vmatprep.subr.mxu0 0.0
      %262 = vmatpush1.msra.mxu0 0.0
      %263 = vmatprep.mubr.f32.mxu0 0.0
      %264 = vmatmul.mubr.f32.gmra.mrb[0].mxu0 %v190
      %v265 = vpop.f32.mrb[0].mxu0
      %v266 = vadd.f32 0.0, %v265
      %v267 = vpop.f32.mrb[0].mxu0
      %268 = vmatprep.mubr.f32.mxu0 0.0
      %269 = vmatmul.mubr.f32.gmra.mrb[0].mxu0 %v193
      %v270 = vpop.f32.mrb[0].mxu0
      %v271 = vadd.f32 0.0, %v270
      %v272 = vpop.f32.mrb[0].mxu0
      %273 = vdwg.mxu0
      %276 = vrot.lane.b32.xlu0 %v266, 127
      %v277 = vpop.permute.xlu0 %276
      %278 = vrot.lane.b32.xlu0 %v271, 127
      %v279 = vpop.permute.xlu0 %278
      %v282 = vadd.f32 %v266, %v277
      %v283 = vadd.f32 %v271, %v279
      %v284 = vxor.u32 %v282, 2147483648
      %v285 = vxor.u32 %v283, 2147483648
      %v286 = vmul.f32 %v284, 1.442695
      %v287 = vpow.pop %v286
      %v288 = vmul.f32 %v285, 1.442695
      %v289 = vpow.pop %v288
      %v290 = vadd.f32 %v287, 1.0
      %v291 = vadd.f32 %v289, 1.0
      %v292 = vrcp.pop %v290
      %v293 = vmul.f32 1.0, %v292
      %v294 = vrcp.pop %v291
      %v295 = vmul.f32 1.0, %v294
      %296 = vst.msk [vmem:[%s3] sm:$0xff] %vm69, %v293
      %297 = vst.msk [vmem:[%s3 + $0x8] sm:$0xff] %vm69, %v295
      %s298 = scalar_lea.vmem [#allocation2], 16
      %v299 = vld [vmem:[%s298] sm:$0xff]
      %v300 = vld [vmem:[%s298 + $0x8] sm:$0xff]
      %v301 = vmul.f32 %v299, %v105
      %v302 = vmul.f32 %v300, %v105
      %303 = vmatprep.subr.mxu0 0.0
      %304 = vmatpush1.msra.mxu0 %v301
      %305 = vmatprep.subr.mxu0 0.0
      %306 = vmatpush1.msra.mxu0 %v302
      %307 = vmatprep.subr.mxu0 0.0
      %308 = vmatpush1.msra.mxu0 0.0
      %309 = vmatprep.subr.mxu0 0.0
      %310 = vmatpush1.msra.mxu0 0.0
      %311 = vmatprep.subr.mxu0 0.0
      %312 = vmatpush1.msra.mxu0 0.0
      %313 = vmatprep.subr.mxu0 0.0
      %314 = vmatpush1.msra.mxu0 0.0
      %315 = vmatprep.subr.mxu0 0.0
      %316 = vmatpush1.msra.mxu0 0.0
      %317 = vmatprep.subr.mxu0 0.0
      %318 = vmatpush1.msra.mxu0 0.0
      %319 = vmatprep.subr.mxu0 0.0
      %320 = vmatpush1.msra.mxu0 0.0
      %321 = vmatprep.subr.mxu0 0.0
      %322 = vmatpush1.msra.mxu0 0.0
      %323 = vmatprep.subr.mxu0 0.0
      %324 = vmatpush1.msra.mxu0 0.0
      %325 = vmatprep.subr.mxu0 0.0
      %326 = vmatpush1.msra.mxu0 0.0
      %327 = vmatprep.subr.mxu0 0.0
      %328 = vmatpush1.msra.mxu0 0.0
      %329 = vmatprep.subr.mxu0 0.0
      %330 = vmatpush1.msra.mxu0 0.0
      %331 = vmatprep.subr.mxu0 0.0
      %332 = vmatpush1.msra.mxu0 0.0
      %333 = vmatprep.subr.mxu0 0.0
      %334 = vmatpush1.msra.mxu0 0.0
      %335 = vmatprep.subr.mxu0 0.0
      %336 = vmatpush1.msra.mxu0 0.0
      %337 = vmatprep.subr.mxu0 0.0
      %338 = vmatpush1.msra.mxu0 0.0
      %339 = vmatprep.subr.mxu0 0.0
      %340 = vmatpush1.msra.mxu0 0.0
      %341 = vmatprep.subr.mxu0 0.0
      %342 = vmatpush1.msra.mxu0 0.0
      %343 = vmatprep.subr.mxu0 0.0
      %344 = vmatpush1.msra.mxu0 0.0
      %345 = vmatprep.subr.mxu0 0.0
      %346 = vmatpush1.msra.mxu0 0.0
      %347 = vmatprep.subr.mxu0 0.0
      %348 = vmatpush1.msra.mxu0 0.0
      %349 = vmatprep.subr.mxu0 0.0
      %350 = vmatpush1.msra.mxu0 0.0
      %351 = vmatprep.subr.mxu0 0.0
      %352 = vmatpush1.msra.mxu0 0.0
      %353 = vmatprep.subr.mxu0 0.0
      %354 = vmatpush1.msra.mxu0 0.0
      %355 = vmatprep.subr.mxu0 0.0
      %356 = vmatpush1.msra.mxu0 0.0
      %357 = vmatprep.subr.mxu0 0.0
      %358 = vmatpush1.msra.mxu0 0.0
      %359 = vmatprep.subr.mxu0 0.0
      %360 = vmatpush1.msra.mxu0 0.0
      %361 = vmatprep.subr.mxu0 0.0
      %362 = vmatpush1.msra.mxu0 0.0
      %363 = vmatprep.subr.mxu0 0.0
      %364 = vmatpush1.msra.mxu0 0.0
      %365 = vmatprep.subr.mxu0 0.0
      %366 = vmatpush1.msra.mxu0 0.0
      %367 = vmatprep.mubr.f32.mxu0 0.0
      %368 = vmatmul.mubr.f32.gmra.mrb[0].mxu0 %v115
      %v369 = vpop.f32.mrb[0].mxu0
      %v370 = vadd.f32 0.0, %v369
      %v371 = vpop.f32.mrb[0].mxu0
      %372 = vdwg.mxu0
      %v373 = vmax.f32 %v370, 0.0
      %v375 = vsel %vm195, %v373, 0
      %377 = vmatprep.subr.mxu0 0.0
      %378 = vmatpush1.msra.mxu0 %v375
      %379 = vmatprep.subr.mxu0 0.0
      %380 = vmatpush1.msra.mxu0 0.0
      %381 = vmatprep.subr.mxu0 0.0
      %382 = vmatpush1.msra.mxu0 0.0
      %383 = vmatprep.subr.mxu0 0.0
      %384 = vmatpush1.msra.mxu0 0.0
      %385 = vmatprep.subr.mxu0 0.0
      %386 = vmatpush1.msra.mxu0 0.0
      %387 = vmatprep.subr.mxu0 0.0
      %388 = vmatpush1.msra.mxu0 0.0
      %389 = vmatprep.subr.mxu0 0.0
      %390 = vmatpush1.msra.mxu0 0.0
      %391 = vmatprep.subr.mxu0 0.0
      %392 = vmatpush1.msra.mxu0 0.0
      %393 = vmatprep.subr.mxu0 0.0
      %394 = vmatpush1.msra.mxu0 0.0
      %395 = vmatprep.subr.mxu0 0.0
      %396 = vmatpush1.msra.mxu0 0.0
      %397 = vmatprep.subr.mxu0 0.0
      %398 = vmatpush1.msra.mxu0 0.0
      %399 = vmatprep.subr.mxu0 0.0
      %400 = vmatpush1.msra.mxu0 0.0
      %401 = vmatprep.subr.mxu0 0.0
      %402 = vmatpush1.msra.mxu0 0.0
      %403 = vmatprep.subr.mxu0 0.0
      %404 = vmatpush1.msra.mxu0 0.0
      %405 = vmatprep.subr.mxu0 0.0
      %406 = vmatpush1.msra.mxu0 0.0
      %407 = vmatprep.subr.mxu0 0.0
      %408 = vmatpush1.msra.mxu0 0.0
      %409 = vmatprep.subr.mxu0 0.0
      %410 = vmatpush1.msra.mxu0 0.0
      %411 = vmatprep.subr.mxu0 0.0
      %412 = vmatpush1.msra.mxu0 0.0
      %413 = vmatprep.subr.mxu0 0.0
      %414 = vmatpush1.msra.mxu0 0.0
      %415 = vmatprep.subr.mxu0 0.0
      %416 = vmatpush1.msra.mxu0 0.0
      %417 = vmatprep.subr.mxu0 0.0
      %418 = vmatpush1.msra.mxu0 0.0
      %419 = vmatprep.subr.mxu0 0.0
      %420 = vmatpush1.msra.mxu0 0.0
      %421 = vmatprep.subr.mxu0 0.0
      %422 = vmatpush1.msra.mxu0 0.0
      %423 = vmatprep.subr.mxu0 0.0
      %424 = vmatpush1.msra.mxu0 0.0
      %425 = vmatprep.subr.mxu0 0.0
      %426 = vmatpush1.msra.mxu0 0.0
      %427 = vmatprep.subr.mxu0 0.0
      %428 = vmatpush1.msra.mxu0 0.0
      %429 = vmatprep.subr.mxu0 0.0
      %430 = vmatpush1.msra.mxu0 0.0
      %431 = vmatprep.subr.mxu0 0.0
      %432 = vmatpush1.msra.mxu0 0.0
      %433 = vmatprep.subr.mxu0 0.0
      %434 = vmatpush1.msra.mxu0 0.0
      %435 = vmatprep.subr.mxu0 0.0
      %436 = vmatpush1.msra.mxu0 0.0
      %437 = vmatprep.subr.mxu0 0.0
      %438 = vmatpush1.msra.mxu0 0.0
      %439 = vmatprep.subr.mxu0 0.0
      %440 = vmatpush1.msra.mxu0 0.0
      %441 = vmatprep.mubr.f32.mxu0 0.0
      %442 = vmatmul.mubr.f32.gmra.mrb[0].mxu0 %v190
      %v443 = vpop.f32.mrb[0].mxu0
      %v444 = vadd.f32 0.0, %v443
      %v445 = vpop.f32.mrb[0].mxu0
      %446 = vmatprep.mubr.f32.mxu0 0.0
      %447 = vmatmul.mubr.f32.gmra.mrb[0].mxu0 %v193
      %v448 = vpop.f32.mrb[0].mxu0
      %v449 = vadd.f32 0.0, %v448
      %v450 = vpop.f32.mrb[0].mxu0
      %451 = vdwg.mxu0
      %454 = vrot.lane.b32.xlu0 %v444, 127
      %v455 = vpop.permute.xlu0 %454
      %456 = vrot.lane.b32.xlu0 %v449, 127
      %v457 = vpop.permute.xlu0 %456
      %v460 = vadd.f32 %v444, %v455
      %v461 = vadd.f32 %v449, %v457
      %v462 = vxor.u32 %v460, 2147483648
      %v463 = vxor.u32 %v461, 2147483648
      %v464 = vmul.f32 %v462, 1.442695
      %v465 = vpow.pop %v464
      %v466 = vmul.f32 %v463, 1.442695
      %v467 = vpow.pop %v466
      %v468 = vadd.f32 %v465, 1.0
      %v469 = vadd.f32 %v467, 1.0
      %v470 = vrcp.pop %v468
      %v471 = vmul.f32 1.0, %v470
      %v472 = vrcp.pop %v469
      %v473 = vmul.f32 1.0, %v472
      %s474 = scalar_lea.vmem %s3, 16
      %475 = vst.msk [vmem:[%s474] sm:$0xff] %vm69, %v471
      %476 = vst.msk [vmem:[%s474 + $0x8] sm:$0xff] %vm69, %v473
    $region25: #{tpu_custom_call.1} parent=1 // pred_fallthru
      _
    // Predicated region
    $region26: #{tpu_custom_call.1} parent=1 // pred_check
      _
    $region27: #{tpu_custom_call.1} parent=1 // pred_check_branch
      %478 = sbr.rel (0) target = $region29
    $region28: #{tpu_custom_call.1} parent=1 // pred_region
      _
    $region29: #{tpu_custom_call.1} parent=1 // pred_fallthru
      _
    // Predicated region
    $region30: #{tpu_custom_call.1} parent=1 // pred_check
      _
    $region31: #{tpu_custom_call.1} parent=1 // pred_check_branch
      %480 = sbr.rel (0) target = $region33
    $region32: #{tpu_custom_call.1} parent=1 // pred_region
      _
    $region33: #{tpu_custom_call.1} parent=1 // pred_fallthru
      _
    %481 = vsyncpa [#allocation4], 1

</llo_original>
